<compile_context>
chip_gen: v7x
topology: tpu7x:2x2x1
jax: 0.10.0
libtpu: 0.0.40
codegen_flags: <defaults>
</compile_context>

<pallas_src>
import functools
import math

import jax
import jax.numpy as jnp
from jax.experimental import pallas as pl
from jax.experimental.pallas import tpu as pltpu

PARAM_DTYPE = jnp.float32
COMPUTE_DTYPE = jnp.bfloat16       # matmul operands / activations; accumulation is f32


def _round_up(x, m):
    return ((x + m - 1) // m) * m


def _cdiv(a, b):
    return -(-a // b)


def _compute_vmem_limit():
    """Per-generation VMEM budget: v7x has 64 MiB/TC, v5e/v6e have 128 MiB."""
    try:
        cap = pltpu.get_tpu_info().vmem_capacity_bytes
        return int(min(cap * 3 // 4, 100 * 2 ** 20))
    except Exception:
        return 40 * 2 ** 20          # safe everywhere (v7x physical VMEM is 64 MiB)


_VMEM_LIMIT = _compute_vmem_limit()


# -----------------------------------------------------------------------------
# Row-tiled matmul (1x1 convs, fused same-input 1x1 branches, strided-conv im2col)
# -----------------------------------------------------------------------------
def _mm_bias_relu_kernel(a_ref, b_ref, c_ref, o_ref):
    """out = relu(A @ B + bias).  A:(TM,K) bf16, B:(K,Cout) bf16 (BN scale folded),
    bias:(1,Cout) f32.  Accumulation in f32 on the MXU."""
    acc = jnp.dot(a_ref[...], b_ref[...], preferred_element_type=jnp.float32)
    o_ref[...] = jnp.maximum(acc + c_ref[...], 0.0).astype(o_ref.dtype)


def _choose_tm(m):
    """Row tile: single grid step for small M (no forced 2-way split that pads tiny
    deep-layer tiles and duplicates weight DMA across v7x cores); ~512-row tiles
    otherwise."""
    steps = max(1, _cdiv(m, 512))
    return _round_up(_cdiv(m, steps), 16)


def _matmul_bias_relu(a, w_mat, bias):
    """relu(a @ w_mat + bias) with a:(M,K), w_mat:(K,Cout) bf16, bias:(Cout,) f32."""
    m, k = a.shape
    cout = w_mat.shape[1]
    tm = _choose_tm(m)
    mp = _round_up(m, tm)
    a = a.astype(COMPUTE_DTYPE)
    if mp != m:
        a = jnp.pad(a, ((0, mp - m), (0, 0)))
    bias2 = bias.reshape(1, cout).astype(jnp.float32)
    nsteps = mp // tm
    out = pl.pallas_call(
        _mm_bias_relu_kernel,
        out_shape=jax.ShapeDtypeStruct((mp, cout), COMPUTE_DTYPE),
        grid=(nsteps,),
        in_specs=[
            pl.BlockSpec((tm, k), lambda i: (i, 0)),
            pl.BlockSpec((k, cout), lambda i: (0, 0)),
            pl.BlockSpec((1, cout), lambda i: (0, 0)),
        ],
        out_specs=pl.BlockSpec((tm, cout), lambda i: (i, 0)),
        compiler_params=pltpu.CompilerParams(
            dimension_semantics=("arbitrary",) if nsteps == 1 else ("parallel",),
            vmem_limit_bytes=_VMEM_LIMIT),
    )(a, w_mat.astype(COMPUTE_DTYPE), bias2)
    return out[:m]


# -----------------------------------------------------------------------------
# Fused stride-1 conv / avg-pool chains: whole feature map in VMEM per image,
# every KxK conv = K*K shifted contiguous row-slices of the flattened map feeding
# MXU matmuls ("wide" trick: rows that straddle the right edge are computed but
# never read back).  Intermediates of a chain never touch HBM.
# -----------------------------------------------------------------------------
def _chain_kernel(geom, *refs):
    nstage = len(geom)
    pos = 1
    params = []
    for g in geom:
        if g['kind'] == 'conv':
            params.append((refs[pos], refs[pos + 1]))
            pos += 2
        else:
            params.append((None, None))
    o_ref = refs[pos]
    scratch = refs[pos + 1:]

    def read(src, is_x, off, length):
        if is_x:
            return src[0, off:off + length, :]
        return src[off:off + length, :]

    src, src_is_x = refs[0], True
    for j, g in enumerate(geom):
        hb, wb, oh, ow = g['hb'], g['wb'], g['oh'], g['ow']
        kh, kw, cin = g['kh'], g['kw'], g['cin']
        mw, mwp = g['mw'], g['mwp']

        if g['kind'] == 'conv':
            w_ref, b_ref = params[j]
            acc = None
            for di in range(kh):
                for dj in range(kw):
                    a = read(src, src_is_x, di * wb + dj, mwp)
                    t = di * kw + dj
                    p = jnp.dot(a, w_ref[t * cin:(t + 1) * cin, :],
                                preferred_element_type=jnp.float32)
                    acc = p if acc is None else acc + p
            act = jnp.maximum(acc + b_ref[...], 0.0)
        else:                               # 3x3 / s1 avg pool, count_include_pad=True
            acc = None
            for di in range(kh):
                for dj in range(kw):
                    a = read(src, src_is_x, di * wb + dj, mwp).astype(jnp.float32)
                    acc = a if acc is None else acc + a
            act = acc * (1.0 / (kh * kw))

        if j + 1 < nstage:
            g2 = geom[j + 1]
            wb2 = g2['wb']
            ph2 = (g2['hb'] - oh) // 2
            pw2 = (wb2 - ow) // 2
            dst = scratch[j]
            if ph2 == 0 and pw2 == 0 and wb == ow:
                dst[0:mw, :] = act[0:mw, :].astype(dst.dtype)
            else:
                if ph2 or pw2:
                    dst[...] = jnp.zeros(dst.shape, dst.dtype)
                for r in range(oh):
                    d0 = (r + ph2) * wb2 + pw2
                    dst[d0:d0 + ow, :] = act[r * wb:r * wb + ow, :].astype(dst.dtype)
            src, src_is_x = dst, False
        else:
            if wb == ow:
                o_ref[0, :, :] = act[0:oh * ow, :].astype(o_ref.dtype)
            else:
                for r in range(oh):
                    o_ref[0, r * ow:(r + 1) * ow, :] = (
                        act[r * wb:r * wb + ow, :].astype(o_ref.dtype))


class _AvgPool3x3:
    kind = 'avg'
    kh = 3
    kw = 3
    padding = (1, 1)
    stride = (1, 1)


_AVG_POOL = _AvgPool3x3()


def _run_conv_chain(x, stages):
    """x: NHWC bf16.  stages: stride-1 BasicConv2d / _AvgPool3x3 applied sequentially
    as ONE pallas_call (grid over the batch, intermediates resident in VMEM)."""
    n, h, w, cin = x.shape
    geom = []
    ch, cw = h, w
    for st in stages:
        assert st.stride == (1, 1)
        ph, pw = st.padding
        hb, wb = ch + 2 * ph, cw + 2 * pw
        oh, ow = hb - st.kh + 1, wb - st.kw + 1
        cout = cin if st.kind == 'avg' else st.cout
        mw = (oh - 1) * wb + ow
        mwp = _round_up(mw, 8)              # keep every MXU matmul at M % 8 == 0
        geom.append(dict(kind=st.kind, kh=st.kh, kw=st.kw, hb=hb, wb=wb,
                         oh=oh, ow=ow, cin=cin, cout=cout, mw=mw, mwp=mwp,
                         rows=hb * wb + (mwp - mw)))
        ch, cw, cin = oh, ow, cout

    g0 = geom[0]
    ph0, pw0 = stages[0].padding
    xp = x
    if ph0 or pw0:
        xp = jnp.pad(x, ((0, 0), (ph0, ph0), (pw0, pw0), (0, 0)))
    xf = xp.reshape(n, g0['hb'] * g0['wb'], g0['cin'])
    extra0 = g0['rows'] - g0['hb'] * g0['wb']
    if extra0:
        xf = jnp.pad(xf, ((0, 0), (0, extra0), (0, 0)))

    inputs = [xf]
    in_specs = [pl.BlockSpec((1, g0['rows'], g0['cin']), lambda i: (i, 0, 0))]
    for st, g in zip(stages, geom):
        if g['kind'] != 'conv':
            continue
        k, cout = st.w_mat.shape
        inputs.append(st.w_mat)
        in_specs.append(pl.BlockSpec((k, cout), lambda i: (0, 0)))
        inputs.append(st.bias.reshape(1, cout).astype(jnp.float32))
        in_specs.append(pl.BlockSpec((1, cout), lambda i: (0, 0)))

    scratch_shapes = [
        pltpu.VMEM((geom[j + 1]['rows'], geom[j]['cout']), COMPUTE_DTYPE)
        for j in range(len(geom) - 1)
    ]

    gl = geom[-1]
    out_rows = gl['oh'] * gl['ow']
    out = pl.pallas_call(
        functools.partial(_chain_kernel, geom),
        out_shape=jax.ShapeDtypeStruct((n, out_rows, gl['cout']), COMPUTE_DTYPE),
        grid=(n,),
        in_specs=in_specs,
        out_specs=pl.BlockSpec((1, out_rows, gl['cout']), lambda i: (i, 0, 0)),
        scratch_shapes=scratch_shapes,
        compiler_params=pltpu.CompilerParams(
            dimension_semantics=("arbitrary",),     # keep weights resident; no weight-DMA
            vmem_limit_bytes=_VMEM_LIMIT),          # duplication across v7x TensorCores
    )(*inputs)
    return out.reshape(n, gl['oh'], gl['ow'], gl['cout'])


# -----------------------------------------------------------------------------
# 3x3 / stride-2 max pool: whole flattened image in VMEM, separable window max;
# the stride-2 column subsample is a tiny XLA slice outside.
# -----------------------------------------------------------------------------
def _maxpool3x3_s2_kernel(h, w, x_ref, o_ref):
    oh1, ow1 = h - 2, w - 2
    lc = h * w - 2
    c0 = x_ref[0, 0:lc, :]
    c1 = x_ref[0, 1:1 + lc, :]
    c2 = x_ref[0, 2:2 + lc, :]
    cm = jnp.maximum(jnp.maximum(c0, c1), c2)
    mw = (oh1 - 1) * w + ow1
    rm = jnp.maximum(jnp.maximum(cm[0:mw, :], cm[w:w + mw, :]),
                     cm[2 * w:2 * w + mw, :])
    for idx, r in enumerate(range(0, oh1, 2)):        # stride-2 rows only
        o_ref[0, idx * ow1:(idx + 1) * ow1, :] = rm[r * w:r * w + ow1, :]


def max_pool_3x3_s2(x):
    n, h, w, c = x.shape
    oh = (h - 3) // 2 + 1
    ow1 = w - 2
    xf = x.reshape(n, h * w, c)
    out = pl.pallas_call(
        functools.partial(_maxpool3x3_s2_kernel, h, w),
        out_shape=jax.ShapeDtypeStruct((n, oh * ow1, c), x.dtype),
        grid=(n,),
        in_specs=[pl.BlockSpec((1, h * w, c), lambda i: (i, 0, 0))],
        out_specs=pl.BlockSpec((1, oh * ow1, c), lambda i: (i, 0, 0)),
        compiler_params=pltpu.CompilerParams(
            dimension_semantics=("arbitrary",),
            vmem_limit_bytes=_VMEM_LIMIT),
    )(xf)
    return out.reshape(n, oh, ow1, c)[:, :, ::2, :]


# -----------------------------------------------------------------------------
# Strided convolutions (5 in the whole net; tiny inputs here) via small im2col
# -----------------------------------------------------------------------------
def _extract_patches(x, kh, kw, stride, padding):
    sh, sw = stride
    ph, pw = padding
    if ph or pw:
        x = jnp.pad(x, ((0, 0), (ph, ph), (pw, pw), (0, 0)))
    n, h, w, c = x.shape
    oh = (h - kh) // sh + 1
    ow = (w - kw) // sw + 1
    taps = []
    for di in range(kh):
        for dj in range(kw):
            taps.append(x[:, di:di + (oh - 1) * sh + 1:sh,
                          dj:dj + (ow - 1) * sw + 1:sw, :])
    return jnp.stack(taps, axis=3)


def _conv_strided(x, conv):
    # TODO(synk): the few stride-2 convs still im2col in XLA (their inputs are tiny at
    # this size); fold the stride into the wide-flat chain kernel if run at 299x299.
    patches = _extract_patches(x, conv.kh, conv.kw, conv.stride, conv.padding)
    n, oh, ow, kk, c = patches.shape
    a = patches.reshape(n * oh * ow, kk * c)
    out = _matmul_bias_relu(a, conv.w_mat, conv.bias)
    return out.reshape(n, oh, ow, conv.cout)


def conv_bn_relu(x, conv):
    """x: NHWC bf16."""
    if conv.stride != (1, 1):
        return _conv_strided(x, conv)
    if conv.kh == 1 and conv.kw == 1 and conv.padding == (0, 0):
        n, h, w, c = x.shape
        out = _matmul_bias_relu(x.reshape(n * h * w, c), conv.w_mat, conv.bias)
        return out.reshape(n, h, w, conv.cout)
    return _run_conv_chain(x, [conv])


# -----------------------------------------------------------------------------
# Deterministic synthetic parameters
# -----------------------------------------------------------------------------
class _ParamGen:
    def __init__(self, seed):
        self._key = jax.random.PRNGKey(seed)
        self._n = 0

    def normal(self, shape):
        k = jax.random.fold_in(self._key, self._n)
        self._n += 1
        return jax.random.normal(k, shape, dtype=PARAM_DTYPE)


def _pair(v):
    return (v, v) if isinstance(v, int) else tuple(v)


class BasicConv2d:
    """Conv2d(bias=False) + BatchNorm2d(eps=1e-3, eval stats) + ReLU.
    BN scale folded into the weight matrix at init; weights stored in bf16."""
    kind = 'conv'

    def __init__(self, pg, cin, cout, kernel_size, stride=1, padding=0):
        kh, kw = _pair(kernel_size)
        self.kh, self.kw = kh, kw
        self.stride = _pair(stride)
        self.padding = _pair(padding)
        self.cin, self.cout = cin, cout
        fan_in = cin * kh * kw
        w = pg.normal((cout, cin, kh, kw)) * (1.0 / math.sqrt(fan_in))
        gamma = 1.0 + 0.1 * pg.normal((cout,))
        beta = 0.1 * pg.normal((cout,))
        mean = 0.1 * pg.normal((cout,))
        var = 1.0 + 0.1 * jnp.abs(pg.normal((cout,)))
        scale = gamma / jnp.sqrt(var + 1e-3)
        bias = beta - mean * scale
        # (Cout,Cin,kh,kw) -> (kh,kw,Cin,Cout) -> (K,Cout); tap-major, matches kernels.
        w_mat = jnp.transpose(w, (2, 3, 1, 0)).reshape(kh * kw * cin, cout) * scale[None, :]
        self.w_mat = w_mat.astype(COMPUTE_DTYPE)
        self.bias = bias.astype(jnp.float32)

    def __call__(self, x):
        return conv_bn_relu(x, self)


class _Fused1x1:
    """Several 1x1 BasicConv2d sharing the same input, executed as one lane-dense
    matmul (weights/biases concatenated along Cout at init); outputs split after."""

    def __init__(self, convs):
        self.splits = [c.cout for c in convs]
        self.w_mat = jnp.concatenate([c.w_mat for c in convs], axis=1)
        self.bias = jnp.concatenate([c.bias for c in convs], axis=0)

    def __call__(self, x):
        n, h, w, c = x.shape
        out = _matmul_bias_relu(x.reshape(n * h * w, c), self.w_mat, self.bias)
        res, off = [], 0
        for co in self.splits:
            res.append(out[:, off:off + co].reshape(n, h, w, co))
            off += co
        return res


# -----------------------------------------------------------------------------
# Inception blocks (torchvision inception_v3 architecture)
# -----------------------------------------------------------------------------
class InceptionA:
    def __init__(self, pg, cin, pool_features):
        self.branch1x1 = BasicConv2d(pg, cin, 64, 1)
        self.branch5x5_1 = BasicConv2d(pg, cin, 48, 1)
        self.branch5x5_2 = BasicConv2d(pg, 48, 64, 5, padding=2)
        self.branch3x3dbl_1 = BasicConv2d(pg, cin, 64, 1)
        self.branch3x3dbl_2 = BasicConv2d(pg, 64, 96, 3, padding=1)
        self.branch3x3dbl_3 = BasicConv2d(pg, 96, 96, 3, padding=1)
        self.branch_pool = BasicConv2d(pg, cin, pool_features, 1)
        self._in1x1 = _Fused1x1([self.branch1x1, self.branch5x5_1, self.branch3x3dbl_1])

    def __call__(self, x):
        b1, b5, bd = self._in1x1(x)
        b5 = _run_conv_chain(b5, [self.branch5x5_2])
        bd = _run_conv_chain(bd, [self.branch3x3dbl_2, self.branch3x3dbl_3])
        bp = _run_conv_chain(x, [_AVG_POOL, self.branch_pool])
        return jnp.concatenate([b1, b5, bd, bp], axis=-1)


class InceptionB:
    def __init__(self, pg, cin):
        self.branch3x3 = BasicConv2d(pg, cin, 384, 3, stride=2)
        self.branch3x3dbl_1 = BasicConv2d(pg, cin, 64, 1)
        self.branch3x3dbl_2 = BasicConv2d(pg, 64, 96, 3, padding=1)
        self.branch3x3dbl_3 = BasicConv2d(pg, 96, 96, 3, stride=2)

    def __call__(self, x):
        b3 = conv_bn_relu(x, self.branch3x3)
        bd = _run_conv_chain(x, [self.branch3x3dbl_1, self.branch3x3dbl_2])
        bd = conv_bn_relu(bd, self.branch3x3dbl_3)
        bp = max_pool_3x3_s2(x)
        return jnp.concatenate([b3, bd, bp], axis=-1)


class InceptionC:
    def __init__(self, pg, cin, channels_7x7):
        c7 = channels_7x7
        self.branch1x1 = BasicConv2d(pg, cin, 192, 1)
        self.branch7x7_1 = BasicConv2d(pg, cin, c7, 1)
        self.branch7x7_2 = BasicConv2d(pg, c7, c7, (1, 7), padding=(0, 3))
        self.branch7x7_3 = BasicConv2d(pg, c7, 192, (7, 1), padding=(3, 0))
        self.branch7x7dbl_1 = BasicConv2d(pg, cin, c7, 1)
        self.branch7x7dbl_2 = BasicConv2d(pg, c7, c7, (7, 1), padding=(3, 0))
        self.branch7x7dbl_3 = BasicConv2d(pg, c7, c7, (1, 7), padding=(0, 3))
        self.branch7x7dbl_4 = BasicConv2d(pg, c7, c7, (7, 1), padding=(3, 0))
        self.branch7x7dbl_5 = BasicConv2d(pg, c7, 192, (1, 7), padding=(0, 3))
        self.branch_pool = BasicConv2d(pg, cin, 192, 1)
        self._in1x1 = _Fused1x1([self.branch1x1, self.branch7x7_1, self.branch7x7dbl_1])

    def __call__(self, x):
        b1, b7, bd = self._in1x1(x)
        b7 = _run_conv_chain(b7, [self.branch7x7_2, self.branch7x7_3])
        bd = _run_conv_chain(bd, [self.branch7x7dbl_2, self.branch7x7dbl_3,
                                  self.branch7x7dbl_4, self.branch7x7dbl_5])
        bp = _run_conv_chain(x, [_AVG_POOL, self.branch_pool])
        return jnp.concatenate([b1, b7, bd, bp], axis=-1)


class InceptionD:
    def __init__(self, pg, cin):
        self.branch3x3_1 = BasicConv2d(pg, cin, 192, 1)
        self.branch3x3_2 = BasicConv2d(pg, 192, 320, 3, stride=2)
        self.branch7x7x3_1 = BasicConv2d(pg, cin, 192, 1)
        self.branch7x7x3_2 = BasicConv2d(pg, 192, 192, (1, 7), padding=(0, 3))
        self.branch7x7x3_3 = BasicConv2d(pg, 192, 192, (7, 1), padding=(3, 0))
        self.branch7x7x3_4 = BasicConv2d(pg, 192, 192, 3, stride=2)
        self._in1x1 = _Fused1x1([self.branch3x3_1, self.branch7x7x3_1])

    def __call__(self, x):
        b3, b7 = self._in1x1(x)
        b3 = conv_bn_relu(b3, self.branch3x3_2)
        b7 = _run_conv_chain(b7, [self.branch7x7x3_2, self.branch7x7x3_3])
        b7 = conv_bn_relu(b7, self.branch7x7x3_4)
        bp = max_pool_3x3_s2(x)
        return jnp.concatenate([b3, b7, bp], axis=-1)


class InceptionE:
    def __init__(self, pg, cin):
        self.branch1x1 = BasicConv2d(pg, cin, 320, 1)
        self.branch3x3_1 = BasicConv2d(pg, cin, 384, 1)
        self.branch3x3_2a = BasicConv2d(pg, 384, 384, (1, 3), padding=(0, 1))
        self.branch3x3_2b = BasicConv2d(pg, 384, 384, (3, 1), padding=(1, 0))
        self.branch3x3dbl_1 = BasicConv2d(pg, cin, 448, 1)
        self.branch3x3dbl_2 = BasicConv2d(pg, 448, 384, 3, padding=1)
        self.branch3x3dbl_3a = BasicConv2d(pg, 384, 384, (1, 3), padding=(0, 1))
        self.branch3x3dbl_3b = BasicConv2d(pg, 384, 384, (3, 1), padding=(1, 0))
        self.branch_pool = BasicConv2d(pg, cin, 192, 1)
        self._in1x1 = _Fused1x1([self.branch1x1, self.branch3x3_1, self.branch3x3dbl_1])

    def __call__(self, x):
        b1, b3, bd = self._in1x1(x)
        b3 = jnp.concatenate([_run_conv_chain(b3, [self.branch3x3_2a]),
                              _run_conv_chain(b3, [self.branch3x3_2b])], axis=-1)
        bd = _run_conv_chain(bd, [self.branch3x3dbl_2])
        bd = jnp.concatenate([_run_conv_chain(bd, [self.branch3x3dbl_3a]),
                              _run_conv_chain(bd, [self.branch3x3dbl_3b])], axis=-1)
        bp = _run_conv_chain(x, [_AVG_POOL, self.branch_pool])
        return jnp.concatenate([b1, b3, bd, bp], axis=-1)


# -----------------------------------------------------------------------------
# Top-level InceptionV3 feature extractor (mirrors the given PyTorch module:
# block0 = 1a,2a,2b; block1 = maxpool,3b,4a; block2 = maxpool,5b..6e; block3 = 7a..7c)
# -----------------------------------------------------------------------------
class InceptionV3:
    DEFAULT_BLOCK_INDEX = 3
    BLOCK_INDEX_BY_DIM = {64: 0, 192: 1, 768: 2, 2048: 3}

    def __init__(self, seed=0, output_blocks=(DEFAULT_BLOCK_INDEX,),
                 resize_input=False, normalize_input=True):
        self.resize_input = resize_input
        self.normalize_input = normalize_input
        self.output_blocks = sorted(output_blocks)
        self.last_needed_block = max(output_blocks)
        assert self.last_needed_block <= 3, "Last possible output block index is 3"
        pg = _ParamGen(seed)
        # block 0
        self.Conv2d_1a_3x3 = BasicConv2d(pg, 3, 32, 3, stride=2)
        self.Conv2d_2a_3x3 = BasicConv2d(pg, 32, 32, 3)
        self.Conv2d_2b_3x3 = BasicConv2d(pg, 32, 64, 3, padding=1)
        # block 1
        if self.last_needed_block >= 1:
            self.Conv2d_3b_1x1 = BasicConv2d(pg, 64, 80, 1)
            self.Conv2d_4a_3x3 = BasicConv2d(pg, 80, 192, 3)
        # block 2
        if self.last_needed_block >= 2:
            self.Mixed_5b = InceptionA(pg, 192, pool_features=32)
            self.Mixed_5c = InceptionA(pg, 256, pool_features=64)
            self.Mixed_5d = InceptionA(pg, 288, pool_features=64)
            self.Mixed_6a = InceptionB(pg, 288)
            self.Mixed_6b = InceptionC(pg, 768, channels_7x7=128)
            self.Mixed_6c = InceptionC(pg, 768, channels_7x7=160)
            self.Mixed_6d = InceptionC(pg, 768, channels_7x7=160)
            self.Mixed_6e = InceptionC(pg, 768, channels_7x7=192)
        # block 3
        if self.last_needed_block >= 3:
            self.Mixed_7a = InceptionD(pg, 768)
            self.Mixed_7b = InceptionE(pg, 1280)
            self.Mixed_7c = InceptionE(pg, 2048)

    def __call__(self, inp):
        """inp: NCHW float tensor with values in (0, 1). Returns list of NCHW maps."""
        # TODO(synk): resize_input=True (bilinear upsample to 299x299) not implemented;
        #             the reference default (resize_input=False) is what is reproduced.
        x = jnp.transpose(inp, (0, 2, 3, 1)).astype(jnp.float32)   # NCHW -> NHWC
        if self.normalize_input:
            x = 2.0 * x - 1.0
        x = x.astype(COMPUTE_DTYPE)
        outp = []

        def _finish():
            return [jnp.transpose(o, (0, 3, 1, 2)).astype(jnp.float32) for o in outp]

        # block 0: Conv2d_1a_3x3 -> Conv2d_2a_3x3 -> Conv2d_2b_3x3
        x = conv_bn_relu(x, self.Conv2d_1a_3x3)                      # 3x3 / s2
        x = _run_conv_chain(x, [self.Conv2d_2a_3x3, self.Conv2d_2b_3x3])
        if 0 in self.output_blocks:
            outp.append(x)
        if self.last_needed_block == 0:
            return _finish()

        # block 1: MaxPool -> Conv2d_3b_1x1 -> Conv2d_4a_3x3
        x = max_pool_3x3_s2(x)
        x = _run_conv_chain(x, [self.Conv2d_3b_1x1, self.Conv2d_4a_3x3])
        if 1 in self.output_blocks:
            outp.append(x)
        if self.last_needed_block == 1:
            return _finish()

        # block 2: MaxPool -> Mixed_5b..Mixed_6e
        x = max_pool_3x3_s2(x)
        for blk in (self.Mixed_5b, self.Mixed_5c, self.Mixed_5d, self.Mixed_6a,
                    self.Mixed_6b, self.Mixed_6c, self.Mixed_6d, self.Mixed_6e):
            x = blk(x)
        if 2 in self.output_blocks:
            outp.append(x)
        if self.last_needed_block == 2:
            return _finish()

        # block 3: Mixed_7a..Mixed_7c
        for blk in (self.Mixed_7a, self.Mixed_7b, self.Mixed_7c):
            x = blk(x)
        if 3 in self.output_blocks:
            outp.append(x)
        return _finish()


if __name__ == "__main__":
    # 75x75 is the smallest spatial size that survives the valid-conv stem plus the
    # three stride-2 reduction stages (final feature map is 1x1 x 2048 channels).
    model = InceptionV3(seed=0)                       # output_blocks=[3] (default)
    key = jax.random.PRNGKey(0)
    x = jax.random.uniform(key, (2, 3, 75, 75), dtype=jnp.float32)   # values in (0, 1)
    feats = model(x)
    feats = [jax.block_until_ready(f) for f in feats]
    assert len(feats) == 1, len(feats)
    assert feats[0].shape == (2, 2048, 1, 1), feats[0].shape
    assert bool(jnp.all(jnp.isfinite(feats[0])))
    print("KERNEL_OK")
</pallas_src>

<mosaic_0001>
module attributes {stable_mosaic.version = 11 : i64} {
  func.func @_mm_bias_relu_kernel(%arg0: i32, %arg1: memref<464x27xbf16, #tpu.memory_space<vmem>>, %arg2: memref<27x32xbf16, #tpu.memory_space<vmem>>, %arg3: memref<1x32xf32, #tpu.memory_space<vmem>>, %arg4: memref<464x32xbf16, #tpu.memory_space<vmem>>) attributes {dimension_semantics = [#tpu.dimension_semantics<parallel>], iteration_bounds = array<i64: 6>, scalar_prefetch = 0 : i64, scratch_operands = 0 : i64, tpu.core_type = #tpu.core_type<tc>, window_params = [{transform_indices = @transform_0, window_bounds = array<i64: 464, 27>}, {pipeline_mode = #tpu.pipeline_mode<synchronous>, transform_indices = @transform_1, window_bounds = array<i64: 27, 32>}, {pipeline_mode = #tpu.pipeline_mode<synchronous>, transform_indices = @transform_2, window_bounds = array<i64: 1, 32>}, {transform_indices = @transform_3, window_bounds = array<i64: 464, 32>}]} {
    %c0 = arith.constant 0 : index
    %c0_0 = arith.constant 0 : index
    %0 = vector.load %arg1[%c0, %c0_0] : memref<464x27xbf16, #tpu.memory_space<vmem>>, vector<464x27xbf16>
    %c0_1 = arith.constant 0 : index
    %c0_2 = arith.constant 0 : index
    %1 = vector.load %arg2[%c0_1, %c0_2] : memref<27x32xbf16, #tpu.memory_space<vmem>>, vector<27x32xbf16>
    %cst = arith.constant dense<0.000000e+00> : vector<464x32xf32>
    %2 = tpu.matmul %0, %1, %cst {dimension_numbers = #tpu.dot_dimension_numbers<[1], [0], [0], [1], [0, 0, 1, 1], [], []>} : vector<464x27xbf16>, vector<27x32xbf16>, vector<464x32xf32> -> vector<464x32xf32>
    %c0_3 = arith.constant 0 : index
    %c0_4 = arith.constant 0 : index
    %3 = vector.load %arg3[%c0_3, %c0_4] : memref<1x32xf32, #tpu.memory_space<vmem>>, vector<1x32xf32>
    %4 = vector.broadcast %3 : vector<1x32xf32> to vector<464x32xf32>
    %5 = arith.addf %2, %4 : vector<464x32xf32>
    %cst_5 = arith.constant 0.000000e+00 : f32
    %6 = vector.broadcast %cst_5 : f32 to vector<464x32xf32>
    %7 = arith.maximumf %5, %6 : vector<464x32xf32>
    %8 = arith.truncf %7 : vector<464x32xf32> to vector<464x32xbf16>
    %c0_6 = arith.constant 0 : index
    %c0_7 = arith.constant 0 : index
    %9 = vector.load %arg4[%c0_6, %c0_7] : memref<464x32xbf16, #tpu.memory_space<vmem>>, vector<464x32xbf16>
    tpu.vector_store %arg4[%c0_6, %c0_7], %8 {strides = array<i32>} : memref<464x32xbf16, #tpu.memory_space<vmem>>, vector<464x32xbf16>,
    return
  }
  func.func @transform_0(%arg0: i32) -> (i32, i32) {
    %c0_i32 = arith.constant 0 : i32
    %c0_i32_0 = arith.constant 0 : i32
    return %arg0, %c0_i32 : i32, i32
  }
  func.func @transform_1(%arg0: i32) -> (i32, i32) {
    %c0_i32 = arith.constant 0 : i32
    %c0_i32_0 = arith.constant 0 : i32
    %c0_i32_1 = arith.constant 0 : i32
    return %c0_i32, %c0_i32_0 : i32, i32
  }
  func.func @transform_2(%arg0: i32) -> (i32, i32) {
    %c0_i32 = arith.constant 0 : i32
    %c0_i32_0 = arith.constant 0 : i32
    %c0_i32_1 = arith.constant 0 : i32
    return %c0_i32, %c0_i32_0 : i32, i32
  }
  func.func @transform_3(%arg0: i32) -> (i32, i32) {
    %c0_i32 = arith.constant 0 : i32
    %c0_i32_0 = arith.constant 0 : i32
    return %arg0, %c0_i32 : i32, i32
  }
}

</mosaic_0001>

<llo_original>
// kernel: tpu_custom_call.1
$region0: #{tpu_custom_call.1}
  #allocation0 [shape = 'u32[]', space=smem, size = 0x4, offset = 0x4, fixed_abs, tag = 'smem constant byte address 0x4 - core index']
  #allocation1 [shape = 'u32[144,128]{1,0:T(1,128)}', space=vmem, size = 0x12000, scoped, tag = 'internal scratch']
  %s0 = inlined_call_operand.vmem [shape: bf16[2784,27], index: 0, kind: input, shape index: {}]
  %s1 = inlined_call_operand.vmem [shape: bf16[27,32], index: 1, kind: input, shape index: {}]
  %s2 = inlined_call_operand.vmem [shape: f32[1,32], index: 2, kind: input, shape index: {}]
  %s3 = inlined_call_operand.vmem [shape: bf16[2784,32], index: 3, kind: output, shape index: {}]
  %s4 = sld [smem:[#allocation0]]
  $region45: #{tpu_custom_call.1} parent=0
    _
  %s6 = ssub.s32 1, %s4
  %s7 = scalar_select 0, %s6, %s4
  loop: start=0, step=1, limit=8
  $region2: #{tpu_custom_call.1} parent=0 // loop_pre_header
    _
  $region3: #{tpu_custom_call.1} parent=0 // loop_header
    %s9 = sphi 0, %s13
    %p10 = scmp.ge.s32.totalorder %s9, 8
    %s19 = sphi 0, %s21
    %s22 = sphi 0, %s19
    %s23 = sphi 0, %s22
    %s39 = sphi 0, %s23
    %s43 = sphi 0, %s43
    %s45 = sphi 0, %s43
    %s46 = sphi 0, %s45
    %s60 = sphi 0, %s46
    %s64 = sphi 0, %s64
    %s66 = sphi 0, %s64
    %s67 = sphi 0, %s66
    %s81 = sphi 0, %s67
    %s87 = sphi 0, %s89
    %s90 = sphi 0, %s87
    %s91 = sphi 0, %s90
    %s107 = sphi 0, %s91
  $region4: #{tpu_custom_call.1} parent=0 // loop_header_branch
    %12 = sbr.rel (%p10) target = $region8
  $region5: #{tpu_custom_call.1} parent=0 // loop_body
    %s14 = ssub.s32 %s9, 1
    %s15 = ssub.s32 %s9, 2
    %s16 = sadd.s32 %s9, 1
    %s17 = ssub.s32 %s9, %s16
    %p18 = scmp.eq.s32.totalorder %s17, 0
    %s20 = sadd.s32 %s19, 1
    %s21 = scalar_select %p18, %s19, %s20
    %p24 = pneg %p18
    %p25 = scmp.eq.s32.totalorder %s9, 5
    %p26 = por %p24, %p25
    %p27 = scmp.ne.s32.totalorder %s19, %s22
    %p28 = scmp.eq.s32.totalorder %s9, 0
    %p29 = por %p27, %p28
    %p30 = scmp.ne.s32.totalorder %s19, %s22
    %p31 = scmp.eq.s32.totalorder %s14, 5
    %p32 = por %p30, %p31
    %p33 = scmp.ne.s32.totalorder %s22, %s23
    %p34 = scmp.eq.s32.totalorder %s14, 0
    %p35 = por %p33, %p34
    %p36 = scmp.ne.s32.totalorder %s22, %s23
    %p37 = scmp.eq.s32.totalorder %s15, 5
    %p38 = por %p36, %p37
    %p40 = scmp.ne.s32.totalorder %s23, %s39
    %p41 = scmp.eq.s32.totalorder %s15, 0
    %p42 = por %p40, %p41
    %s44 = sadd.s32 %s43, 1
    %p47 = scmp.eq.s32.totalorder %s9, 5
    %p48 = scmp.ne.s32.totalorder %s43, %s45
    %p49 = scmp.eq.s32.totalorder %s9, 0
    %p50 = por %p48, %p49
    %p51 = scmp.ne.s32.totalorder %s43, %s45
    %p52 = scmp.eq.s32.totalorder %s14, 5
    %p53 = por %p51, %p52
    %p54 = scmp.ne.s32.totalorder %s45, %s46
    %p55 = scmp.eq.s32.totalorder %s14, 0
    %p56 = por %p54, %p55
    %p57 = scmp.ne.s32.totalorder %s45, %s46
    %p58 = scmp.eq.s32.totalorder %s15, 5
    %p59 = por %p57, %p58
    %p61 = scmp.ne.s32.totalorder %s46, %s60
    %p62 = scmp.eq.s32.totalorder %s15, 0
    %p63 = por %p61, %p62
    %s65 = sadd.s32 %s64, 1
    %p68 = scmp.eq.s32.totalorder %s9, 5
    %p69 = scmp.ne.s32.totalorder %s64, %s66
    %p70 = scmp.eq.s32.totalorder %s9, 0
    %p71 = por %p69, %p70
    %p72 = scmp.ne.s32.totalorder %s64, %s66
    %p73 = scmp.eq.s32.totalorder %s14, 5
    %p74 = por %p72, %p73
    %p75 = scmp.ne.s32.totalorder %s66, %s67
    %p76 = scmp.eq.s32.totalorder %s14, 0
    %p77 = por %p75, %p76
    %p78 = scmp.ne.s32.totalorder %s66, %s67
    %p79 = scmp.eq.s32.totalorder %s15, 5
    %p80 = por %p78, %p79
    %p82 = scmp.ne.s32.totalorder %s67, %s81
    %p83 = scmp.eq.s32.totalorder %s15, 0
    %p84 = por %p82, %p83
    %s85 = ssub.s32 %s9, %s16
    %p86 = scmp.eq.s32.totalorder %s85, 0
    %s88 = sadd.s32 %s87, 1
    %s89 = scalar_select %p86, %s87, %s88
    %p92 = pneg %p86
    %p93 = scmp.eq.s32.totalorder %s9, 5
    %p94 = por %p92, %p93
    %p95 = scmp.ne.s32.totalorder %s87, %s90
    %p96 = scmp.eq.s32.totalorder %s9, 0
    %p97 = por %p95, %p96
    %p98 = scmp.ne.s32.totalorder %s87, %s90
    %p99 = scmp.eq.s32.totalorder %s14, 5
    %p100 = por %p98, %p99
    %p101 = scmp.ne.s32.totalorder %s90, %s91
    %p102 = scmp.eq.s32.totalorder %s14, 0
    %p103 = por %p101, %p102
    %p104 = scmp.ne.s32.totalorder %s90, %s91
    %p105 = scmp.eq.s32.totalorder %s15, 5
    %p106 = por %p104, %p105
    %p108 = scmp.ne.s32.totalorder %s91, %s107
    %p109 = scmp.eq.s32.totalorder %s15, 0
    %p110 = por %p108, %p109
    %p111 = scmp.le.s32.totalorder 1, %s9
    %p112 = scmp.lt.s32.totalorder %s9, 7
    %p113 = pnand %p111, %p112
    %p114 = pneg %p113
    // Predicated region
    $region9: #{tpu_custom_call.1} parent=5 // pred_check
      _
    $region10: #{tpu_custom_call.1} parent=5 // pred_check_branch
      %116 = sbr.rel (%p113) target = $region12
    $region11: #{tpu_custom_call.1} parent=5 // pred_region
      %s117 = ssub.s32 %s9, 1
      // Predicated region
      $region13: #{tpu_custom_call.1} parent=11 // pred_check
        %p118 = pneg %p56
      $region14: #{tpu_custom_call.1} parent=11 // pred_check_branch
        %120 = sbr.rel (%p118) target = $region16
      $region15: #{tpu_custom_call.1} parent=11 // pred_region
        _
      $region16: #{tpu_custom_call.1} parent=11 // pred_fallthru
        _
      // Predicated region
      $region17: #{tpu_custom_call.1} parent=11 // pred_check
        %p121 = pneg %p77
      $region18: #{tpu_custom_call.1} parent=11 // pred_check_branch
        %123 = sbr.rel (%p121) target = $region20
      $region19: #{tpu_custom_call.1} parent=11 // pred_region
        _
      $region20: #{tpu_custom_call.1} parent=11 // pred_fallthru
        _
    $region12: #{tpu_custom_call.1} parent=5 // pred_fallthru
      _
    %p124 = scmp.lt.s32.totalorder %s9, 6
    // Predicated region
    $region21: #{tpu_custom_call.1} parent=5 // pred_check
      %p125 = pneg %p124
    $region22: #{tpu_custom_call.1} parent=5 // pred_check_branch
      %127 = sbr.rel (%p125) target = $region24
    $region23: #{tpu_custom_call.1} parent=5 // pred_region
      // Predicated region
      $region25: #{tpu_custom_call.1} parent=23 // pred_check
        %p128 = pneg %p29
      $region26: #{tpu_custom_call.1} parent=23 // pred_check_branch
        %130 = sbr.rel (%p128) target = $region28
      $region27: #{tpu_custom_call.1} parent=23 // pred_region
        %s131 = smul.u32 58, %s9
        %p132 = scmp.lt.s32.totalorder %s131, 347
        %s133 = scalar_select %p132, %s131, 347
        %s134 = smul.addr %s133, 4
        %s135 = scalar_lea.vmem %s0, %s134
        %s136 = smul.u32 58, %s9
      $region28: #{tpu_custom_call.1} parent=23 // pred_fallthru
        _
    $region24: #{tpu_custom_call.1} parent=5 // pred_fallthru
      _
    %p137 = scmp.le.s32.totalorder 1, %s9
    %p138 = scmp.lt.s32.totalorder %s9, 7
    %p139 = pnand %p137, %p138
    %p140 = pneg %p139
    // Predicated region
    $region29: #{tpu_custom_call.1} parent=5 // pred_check
      _
    $region30: #{tpu_custom_call.1} parent=5 // pred_check_branch
      %142 = sbr.rel (%p139) target = $region32
    $region31: #{tpu_custom_call.1} parent=5 // pred_region
      %s143 = ssub.s32 %s9, 1
      %s144 = smul.u32 58, %s14
      %p145 = scmp.lt.s32.totalorder %s144, 347
      %s146 = scalar_select %p145, %s144, 347
      %s147 = smul.addr %s146, 4
      %s148 = scalar_lea.vmem %s0, %s147
      %p149 = pneg %p35
      %p150 = pneg %p32
      %p151 = pneg %p56
      %p152 = pneg %p53
      %p153 = pneg %p77
      %p154 = pneg %p74
      %p155 = pneg %p103
      %p156 = pneg %p100
      %s157 = smul.u32 58, %s14
      %p158 = scmp.lt.s32.totalorder %s157, 347
      %s159 = scalar_select %p158, %s157, 347
      %s160 = smul.addr %s159, 4
      %s161 = scalar_lea.vmem %s3, %s160
      %s162 = smul.u32 58, %s14
      %p163 = scmp.lt.s32.totalorder %s162, 347
      %s164 = scalar_select %p163, %s162, 347
      %s165 = smul.addr %s164, 4
      %s166 = scalar_lea.vmem %s0, %s165
      %s167 = smul.u32 58, %s14
      %s168 = smul.u32 58, %s14
      %p169 = scmp.lt.s32.totalorder %s168, 347
      %s170 = scalar_select %p169, %s168, 347
      %s171 = smul.addr %s170, 4
      %s172 = scalar_lea.vmem %s3, %s171
      %s173 = smul.u32 58, %s14
      %v175 = vld [vmem:[%s166] sm:$0xf]
      %v176 = vld [vmem:[%s166 + $0x4] sm:$0xf]
      %v177 = vld [vmem:[%s166 + $0x8] sm:$0xf]
      %v178 = vld [vmem:[%s166 + $0xc] sm:$0xf]
      %v179 = vld [vmem:[%s166 + $0x10] sm:$0xf]
      %v180 = vld [vmem:[%s166 + $0x14] sm:$0xf]
      %v181 = vld [vmem:[%s166 + $0x18] sm:$0xf]
      %v182 = vld [vmem:[%s166 + $0x1c] sm:$0xf]
      %v183 = vld [vmem:[%s166 + $0x20] sm:$0xf]
      %v184 = vld [vmem:[%s166 + $0x24] sm:$0xf]
      %v185 = vld [vmem:[%s166 + $0x28] sm:$0xf]
      %v186 = vld [vmem:[%s166 + $0x2c] sm:$0xf]
      %v187 = vld [vmem:[%s166 + $0x30] sm:$0xf]
      %v188 = vld [vmem:[%s166 + $0x34] sm:$0xf]
      %v189 = vld [vmem:[%s166 + $0x38] sm:$0xf]
      %v190 = vld [vmem:[%s166 + $0x3c] sm:$0xf]
      %v191 = vld [vmem:[%s166 + $0x40] sm:$0xf]
      %v192 = vld [vmem:[%s166 + $0x44] sm:$0xf]
      %v193 = vld [vmem:[%s166 + $0x48] sm:$0xf]
      %v194 = vld [vmem:[%s166 + $0x4c] sm:$0xf]
      %v195 = vld [vmem:[%s166 + $0x50] sm:$0xf]
      %v196 = vld [vmem:[%s166 + $0x54] sm:$0xf]
      %v197 = vld [vmem:[%s166 + $0x58] sm:$0xf]
      %v198 = vld [vmem:[%s166 + $0x5c] sm:$0xf]
      %v199 = vld [vmem:[%s166 + $0x60] sm:$0xf]
      %v200 = vld [vmem:[%s166 + $0x64] sm:$0xf]
      %v201 = vld [vmem:[%s166 + $0x68] sm:$0xf]
      %v202 = vld [vmem:[%s166 + $0x6c] sm:$0xf]
      %v203 = vld [vmem:[%s166 + $0x70] sm:$0xf]
      %v204 = vld [vmem:[%s166 + $0x74] sm:$0xf]
      %v205 = vld [vmem:[%s166 + $0x78] sm:$0xf]
      %v206 = vld [vmem:[%s166 + $0x7c] sm:$0xf]
      %v207 = vld [vmem:[%s166 + $0x80] sm:$0xf]
      %v208 = vld [vmem:[%s166 + $0x84] sm:$0xf]
      %v209 = vld [vmem:[%s166 + $0x88] sm:$0xf]
      %v210 = vld [vmem:[%s166 + $0x8c] sm:$0xf]
      %v211 = vld [vmem:[%s166 + $0x90] sm:$0xf]
      %v212 = vld [vmem:[%s166 + $0x94] sm:$0xf]
      %v213 = vld [vmem:[%s166 + $0x98] sm:$0xf]
      %v214 = vld [vmem:[%s166 + $0x9c] sm:$0xf]
      %v215 = vld [vmem:[%s166 + $0xa0] sm:$0xf]
      %v216 = vld [vmem:[%s166 + $0xa4] sm:$0xf]
      %v217 = vld [vmem:[%s166 + $0xa8] sm:$0xf]
      %v218 = vld [vmem:[%s166 + $0xac] sm:$0xf]
      %v219 = vld [vmem:[%s166 + $0xb0] sm:$0xf]
      %v220 = vld [vmem:[%s166 + $0xb4] sm:$0xf]
      %v221 = vld [vmem:[%s166 + $0xb8] sm:$0xf]
      %v222 = vld [vmem:[%s166 + $0xbc] sm:$0xf]
      %v223 = vld [vmem:[%s166 + $0xc0] sm:$0xf]
      %v224 = vld [vmem:[%s166 + $0xc4] sm:$0xf]
      %v225 = vld [vmem:[%s166 + $0xc8] sm:$0xf]
      %v226 = vld [vmem:[%s166 + $0xcc] sm:$0xf]
      %v227 = vld [vmem:[%s166 + $0xd0] sm:$0xf]
      %v228 = vld [vmem:[%s166 + $0xd4] sm:$0xf]
      %v229 = vld [vmem:[%s166 + $0xd8] sm:$0xf]
      %v230 = vld [vmem:[%s166 + $0xdc] sm:$0xf]
      %v231 = vld [vmem:[%s166 + $0xe0] sm:$0xf]
      %v232 = vld [vmem:[%s166 + $0xe4] sm:$0xf]
      %v233 = vld [vmem:[%s1] sm:$0xf]
      %v234 = vld [vmem:[%s1 + $0x4] sm:$0xf]
      %v235 = vld [vmem:[%s1 + $0x8] sm:$0xf]
      %v236 = vld [vmem:[%s1 + $0xc] sm:$0x3]
      %v237 = vld [vmem:[%s2] sm:$0x1]
      %v239 = vlaneseq
      %v240 = vshrl.u32 %v239, 7
      %v241 = vsub.s32 0, %v240
      %v242 = vrot.slane %v237, %v241
      %v302 = vunpack.c.l.b16 %v175
      %v303 = vunpack.c.l.b16 %v176
      %v304 = vunpack.c.l.b16 %v177
      %v305 = vunpack.c.l.b16 %v178
      %v306 = vunpack.c.l.b16 %v179
      %v307 = vunpack.c.l.b16 %v180
      %v308 = vunpack.c.l.b16 %v181
      %v309 = vunpack.c.l.b16 %v182
      %v310 = vunpack.c.l.b16 %v183
      %v311 = vunpack.c.l.b16 %v184
      %v312 = vunpack.c.l.b16 %v185
      %v313 = vunpack.c.l.b16 %v186
      %v314 = vunpack.c.l.b16 %v187
      %v315 = vunpack.c.l.b16 %v188
      %v316 = vunpack.c.l.b16 %v189
      %v317 = vunpack.c.l.b16 %v190
      %v318 = vunpack.c.l.b16 %v191
      %v319 = vunpack.c.l.b16 %v192
      %v320 = vunpack.c.l.b16 %v193
      %v321 = vunpack.c.l.b16 %v194
      %v322 = vunpack.c.l.b16 %v195
      %v323 = vunpack.c.l.b16 %v196
      %v324 = vunpack.c.l.b16 %v197
      %v325 = vunpack.c.l.b16 %v198
      %v326 = vunpack.c.l.b16 %v199
      %v327 = vunpack.c.l.b16 %v200
      %v328 = vunpack.c.l.b16 %v201
      %v329 = vunpack.c.l.b16 %v202
      %v330 = vunpack.c.l.b16 %v203
      %v331 = vunpack.c.l.b16 %v204
      %v332 = vunpack.c.l.b16 %v205
      %v333 = vunpack.c.l.b16 %v206
      %v334 = vunpack.c.l.b16 %v207
      %v335 = vunpack.c.l.b16 %v208
      %v336 = vunpack.c.l.b16 %v209
      %v337 = vunpack.c.l.b16 %v210
      %v338 = vunpack.c.l.b16 %v211
      %v339 = vunpack.c.l.b16 %v212
      %v340 = vunpack.c.l.b16 %v213
      %v341 = vunpack.c.l.b16 %v214
      %v342 = vunpack.c.l.b16 %v215
      %v343 = vunpack.c.l.b16 %v216
      %v344 = vunpack.c.l.b16 %v217
      %v345 = vunpack.c.l.b16 %v218
      %v346 = vunpack.c.l.b16 %v219
      %v347 = vunpack.c.l.b16 %v220
      %v348 = vunpack.c.l.b16 %v221
      %v349 = vunpack.c.l.b16 %v222
      %v350 = vunpack.c.l.b16 %v223
      %v351 = vunpack.c.l.b16 %v224
      %v352 = vunpack.c.l.b16 %v225
      %v353 = vunpack.c.l.b16 %v226
      %v354 = vunpack.c.l.b16 %v227
      %v355 = vunpack.c.l.b16 %v228
      %v356 = vunpack.c.l.b16 %v229
      %v357 = vunpack.c.l.b16 %v230
      %v358 = vunpack.c.l.b16 %v231
      %v359 = vunpack.c.l.b16 %v232
      %v360 = vpack.c.b16 %v303, %v302
      %v361 = vpack.c.b16 %v305, %v304
      %v362 = vpack.c.b16 %v307, %v306
      %v363 = vpack.c.b16 %v309, %v308
      %v364 = vpack.c.b16 %v311, %v310
      %v365 = vpack.c.b16 %v313, %v312
      %v366 = vpack.c.b16 %v315, %v314
      %v367 = vpack.c.b16 %v317, %v316
      %v368 = vpack.c.b16 %v319, %v318
      %v369 = vpack.c.b16 %v321, %v320
      %v370 = vpack.c.b16 %v323, %v322
      %v371 = vpack.c.b16 %v325, %v324
      %v372 = vpack.c.b16 %v327, %v326
      %v373 = vpack.c.b16 %v329, %v328
      %v374 = vpack.c.b16 %v331, %v330
      %v375 = vpack.c.b16 %v333, %v332
      %v376 = vpack.c.b16 %v335, %v334
      %v377 = vpack.c.b16 %v337, %v336
      %v378 = vpack.c.b16 %v339, %v338
      %v379 = vpack.c.b16 %v341, %v340
      %v380 = vpack.c.b16 %v343, %v342
      %v381 = vpack.c.b16 %v345, %v344
      %v382 = vpack.c.b16 %v347, %v346
      %v383 = vpack.c.b16 %v349, %v348
      %v384 = vpack.c.b16 %v351, %v350
      %v385 = vpack.c.b16 %v353, %v352
      %v386 = vpack.c.b16 %v355, %v354
      %v387 = vpack.c.b16 %v357, %v356
      %v388 = vpack.c.b16 %v359, %v358
      %v393 = vunpack.c.l.b16 %v233
      %v394 = vunpack.c.l.b16 %v234
      %v395 = vunpack.c.l.b16 %v235
      %v396 = vunpack.c.l.b16 %v236
      %v397 = vpack.c.b16 %v394, %v393
      %v398 = vpack.c.b16 %v396, %v395
      %vm400 = vcmask 220160
      %v402 = vsel %vm400, %v360, 0
      %v405 = vsel %vm400, %v361, 0
      %v408 = vsel %vm400, %v362, 0
      %v411 = vsel %vm400, %v363, 0
      %v414 = vsel %vm400, %v364, 0
      %v417 = vsel %vm400, %v365, 0
      %v420 = vsel %vm400, %v366, 0
      %v423 = vsel %vm400, %v367, 0
      %v426 = vsel %vm400, %v368, 0
      %v429 = vsel %vm400, %v369, 0
      %v432 = vsel %vm400, %v370, 0
      %v435 = vsel %vm400, %v371, 0
      %v438 = vsel %vm400, %v372, 0
      %v441 = vsel %vm400, %v373, 0
      %v444 = vsel %vm400, %v374, 0
      %v447 = vsel %vm400, %v375, 0
      %v450 = vsel %vm400, %v376, 0
      %v453 = vsel %vm400, %v377, 0
      %v456 = vsel %vm400, %v378, 0
      %v459 = vsel %vm400, %v379, 0
      %v462 = vsel %vm400, %v380, 0
      %v465 = vsel %vm400, %v381, 0
      %v468 = vsel %vm400, %v382, 0
      %v471 = vsel %vm400, %v383, 0
      %v474 = vsel %vm400, %v384, 0
      %v477 = vsel %vm400, %v385, 0
      %v480 = vsel %vm400, %v386, 0
      %v483 = vsel %vm400, %v387, 0
      %v486 = vsel %vm400, %v388, 0
      %vm488 = vcmask 1044480
      %vm489 = vcmask 1045504
      %v490 = vsel %vm488, 4294967295, 65535
      %v491 = vsel %vm489, %v490, 0
      %v493 = vand.u32 %v398, %v491
      %495 = vmatprep.subr.bf16.mxu0 0
      %496 = vmatpush1.bf16.msra.mxu0 %v397
      %497 = vmatprep.subr.bf16.mxu0 0
      %498 = vmatpush1.bf16.msra.mxu0 %v493
      %499 = vmatprep.subr.bf16.mxu0 0
      %500 = vmatpush1.bf16.msra.mxu0 0
      %501 = vmatprep.subr.bf16.mxu0 0
      %502 = vmatpush1.bf16.msra.mxu0 0
      %503 = vmatprep.subr.bf16.mxu0 0
      %504 = vmatpush1.bf16.msra.mxu0 0
      %505 = vmatprep.subr.bf16.mxu0 0
      %506 = vmatpush1.bf16.msra.mxu0 0
      %507 = vmatprep.subr.bf16.mxu0 0
      %508 = vmatpush1.bf16.msra.mxu0 0
      %509 = vmatprep.subr.bf16.mxu0 0
      %510 = vmatpush1.bf16.msra.mxu0 0
      %511 = vmatprep.subr.bf16.mxu0 0
      %512 = vmatpush1.bf16.msra.mxu0 0
      %513 = vmatprep.subr.bf16.mxu0 0
      %514 = vmatpush1.bf16.msra.mxu0 0
      %515 = vmatprep.subr.bf16.mxu0 0
      %516 = vmatpush1.bf16.msra.mxu0 0
      %517 = vmatprep.subr.bf16.mxu0 0
      %518 = vmatpush1.bf16.msra.mxu0 0
      %519 = vmatprep.subr.bf16.mxu0 0
      %520 = vmatpush1.bf16.msra.mxu0 0
      %521 = vmatprep.subr.bf16.mxu0 0
      %522 = vmatpush1.bf16.msra.mxu0 0
      %523 = vmatprep.subr.bf16.mxu0 0
      %524 = vmatpush1.bf16.msra.mxu0 0
      %525 = vmatprep.subr.bf16.mxu0 0
      %526 = vmatpush1.bf16.msra.mxu0 0
      %527 = vmatprep.mubr.bf16.mxu0 0
      %528 = vmatmul.mubr.bf16.gmra.mrb[0].mxu0 %v402
      %v529 = vpop.f32.mrb[0].mxu0
      %v530 = vadd.f32 %v242, %v529
      %v531 = vpop.f32.mrb[0].mxu0
      %v532 = vpop.f32.mrb[0].mxu0
      %v533 = vadd.f32 %v242, %v532
      %v534 = vpop.f32.mrb[0].mxu0
      %535 = vmatprep.mubr.bf16.mxu0 0
      %536 = vmatmul.mubr.bf16.gmra.mrb[0].mxu0 %v405
      %v537 = vpop.f32.mrb[0].mxu0
      %v538 = vadd.f32 %v242, %v537
      %v539 = vpop.f32.mrb[0].mxu0
      %v540 = vpop.f32.mrb[0].mxu0
      %v541 = vadd.f32 %v242, %v540
      %v542 = vpop.f32.mrb[0].mxu0
      %543 = vmatprep.mubr.bf16.mxu0 0
      %544 = vmatmul.mubr.bf16.gmra.mrb[0].mxu0 %v408
      %v545 = vpop.f32.mrb[0].mxu0
      %v546 = vadd.f32 %v242, %v545
      %v547 = vpop.f32.mrb[0].mxu0
      %v548 = vpop.f32.mrb[0].mxu0
      %v549 = vadd.f32 %v242, %v548
      %v550 = vpop.f32.mrb[0].mxu0
      %551 = vmatprep.mubr.bf16.mxu0 0
      %552 = vmatmul.mubr.bf16.gmra.mrb[0].mxu0 %v411
      %v553 = vpop.f32.mrb[0].mxu0
      %v554 = vadd.f32 %v242, %v553
      %v555 = vpop.f32.mrb[0].mxu0
      %v556 = vpop.f32.mrb[0].mxu0
      %v557 = vadd.f32 %v242, %v556
      %v558 = vpop.f32.mrb[0].mxu0
      %559 = vmatprep.mubr.bf16.mxu0 0
      %560 = vmatmul.mubr.bf16.gmra.mrb[0].mxu0 %v414
      %v561 = vpop.f32.mrb[0].mxu0
      %v562 = vadd.f32 %v242, %v561
      %v563 = vpop.f32.mrb[0].mxu0
      %v564 = vpop.f32.mrb[0].mxu0
      %v565 = vadd.f32 %v242, %v564
      %v566 = vpop.f32.mrb[0].mxu0
      %567 = vmatprep.mubr.bf16.mxu0 0
      %568 = vmatmul.mubr.bf16.gmra.mrb[0].mxu0 %v417
      %v569 = vpop.f32.mrb[0].mxu0
      %v570 = vadd.f32 %v242, %v569
      %v571 = vpop.f32.mrb[0].mxu0
      %v572 = vpop.f32.mrb[0].mxu0
      %v573 = vadd.f32 %v242, %v572
      %v574 = vpop.f32.mrb[0].mxu0
      %575 = vmatprep.mubr.bf16.mxu0 0
      %576 = vmatmul.mubr.bf16.gmra.mrb[0].mxu0 %v420
      %v577 = vpop.f32.mrb[0].mxu0
      %v578 = vadd.f32 %v242, %v577
      %v579 = vpop.f32.mrb[0].mxu0
      %v580 = vpop.f32.mrb[0].mxu0
      %v581 = vadd.f32 %v242, %v580
      %v582 = vpop.f32.mrb[0].mxu0
      %583 = vmatprep.mubr.bf16.mxu0 0
      %584 = vmatmul.mubr.bf16.gmra.mrb[0].mxu0 %v423
      %v585 = vpop.f32.mrb[0].mxu0
      %v586 = vadd.f32 %v242, %v585
      %v587 = vpop.f32.mrb[0].mxu0
      %v588 = vpop.f32.mrb[0].mxu0
      %v589 = vadd.f32 %v242, %v588
      %v590 = vpop.f32.mrb[0].mxu0
      %591 = vmatprep.mubr.bf16.mxu0 0
      %592 = vmatmul.mubr.bf16.gmra.mrb[0].mxu0 %v426
      %v593 = vpop.f32.mrb[0].mxu0
      %v594 = vadd.f32 %v242, %v593
      %v595 = vpop.f32.mrb[0].mxu0
      %v596 = vpop.f32.mrb[0].mxu0
      %v597 = vadd.f32 %v242, %v596
      %v598 = vpop.f32.mrb[0].mxu0
      %599 = vmatprep.mubr.bf16.mxu0 0
      %600 = vmatmul.mubr.bf16.gmra.mrb[0].mxu0 %v429
      %v601 = vpop.f32.mrb[0].mxu0
      %v602 = vadd.f32 %v242, %v601
      %v603 = vpop.f32.mrb[0].mxu0
      %v604 = vpop.f32.mrb[0].mxu0
      %v605 = vadd.f32 %v242, %v604
      %v606 = vpop.f32.mrb[0].mxu0
      %607 = vmatprep.mubr.bf16.mxu0 0
      %608 = vmatmul.mubr.bf16.gmra.mrb[0].mxu0 %v432
      %v609 = vpop.f32.mrb[0].mxu0
      %v610 = vadd.f32 %v242, %v609
      %v611 = vpop.f32.mrb[0].mxu0
      %v612 = vpop.f32.mrb[0].mxu0
      %v613 = vadd.f32 %v242, %v612
      %v614 = vpop.f32.mrb[0].mxu0
      %615 = vmatprep.mubr.bf16.mxu0 0
      %616 = vmatmul.mubr.bf16.gmra.mrb[0].mxu0 %v435
      %v617 = vpop.f32.mrb[0].mxu0
      %v618 = vadd.f32 %v242, %v617
      %v619 = vpop.f32.mrb[0].mxu0
      %v620 = vpop.f32.mrb[0].mxu0
      %v621 = vadd.f32 %v242, %v620
      %v622 = vpop.f32.mrb[0].mxu0
      %623 = vmatprep.mubr.bf16.mxu0 0
      %624 = vmatmul.mubr.bf16.gmra.mrb[0].mxu0 %v438
      %v625 = vpop.f32.mrb[0].mxu0
      %v626 = vadd.f32 %v242, %v625
      %v627 = vpop.f32.mrb[0].mxu0
      %v628 = vpop.f32.mrb[0].mxu0
      %v629 = vadd.f32 %v242, %v628
      %v630 = vpop.f32.mrb[0].mxu0
      %631 = vmatprep.mubr.bf16.mxu0 0
      %632 = vmatmul.mubr.bf16.gmra.mrb[0].mxu0 %v441
      %v633 = vpop.f32.mrb[0].mxu0
      %v634 = vadd.f32 %v242, %v633
      %v635 = vpop.f32.mrb[0].mxu0
      %v636 = vpop.f32.mrb[0].mxu0
      %v637 = vadd.f32 %v242, %v636
      %v638 = vpop.f32.mrb[0].mxu0
      %639 = vmatprep.mubr.bf16.mxu0 0
      %640 = vmatmul.mubr.bf16.gmra.mrb[0].mxu0 %v444
      %v641 = vpop.f32.mrb[0].mxu0
      %v642 = vadd.f32 %v242, %v641
      %v643 = vpop.f32.mrb[0].mxu0
      %v644 = vpop.f32.mrb[0].mxu0
      %v645 = vadd.f32 %v242, %v644
      %v646 = vpop.f32.mrb[0].mxu0
      %647 = vmatprep.mubr.bf16.mxu0 0
      %648 = vmatmul.mubr.bf16.gmra.mrb[0].mxu0 %v447
      %v649 = vpop.f32.mrb[0].mxu0
      %v650 = vadd.f32 %v242, %v649
      %v651 = vpop.f32.mrb[0].mxu0
      %v652 = vpop.f32.mrb[0].mxu0
      %v653 = vadd.f32 %v242, %v652
      %v654 = vpop.f32.mrb[0].mxu0
      %655 = vmatprep.mubr.bf16.mxu0 0
      %656 = vmatmul.mubr.bf16.gmra.mrb[0].mxu0 %v450
      %v657 = vpop.f32.mrb[0].mxu0
      %v658 = vadd.f32 %v242, %v657
      %v659 = vpop.f32.mrb[0].mxu0
      %v660 = vpop.f32.mrb[0].mxu0
      %v661 = vadd.f32 %v242, %v660
      %v662 = vpop.f32.mrb[0].mxu0
      %663 = vmatprep.mubr.bf16.mxu0 0
      %664 = vmatmul.mubr.bf16.gmra.mrb[0].mxu0 %v453
      %v665 = vpop.f32.mrb[0].mxu0
      %v666 = vadd.f32 %v242, %v665
      %v667 = vpop.f32.mrb[0].mxu0
      %v668 = vpop.f32.mrb[0].mxu0
      %v669 = vadd.f32 %v242, %v668
      %v670 = vpop.f32.mrb[0].mxu0
      %671 = vmatprep.mubr.bf16.mxu0 0
      %672 = vmatmul.mubr.bf16.gmra.mrb[0].mxu0 %v456
      %v673 = vpop.f32.mrb[0].mxu0
      %v674 = vadd.f32 %v242, %v673
      %v675 = vpop.f32.mrb[0].mxu0
      %v676 = vpop.f32.mrb[0].mxu0
      %v677 = vadd.f32 %v242, %v676
      %v678 = vpop.f32.mrb[0].mxu0
      %679 = vmatprep.mubr.bf16.mxu0 0
      %680 = vmatmul.mubr.bf16.gmra.mrb[0].mxu0 %v459
      %v681 = vpop.f32.mrb[0].mxu0
      %v682 = vadd.f32 %v242, %v681
      %v683 = vpop.f32.mrb[0].mxu0
      %v684 = vpop.f32.mrb[0].mxu0
      %v685 = vadd.f32 %v242, %v684
      %v686 = vpop.f32.mrb[0].mxu0
      %687 = vmatprep.mubr.bf16.mxu0 0
      %688 = vmatmul.mubr.bf16.gmra.mrb[0].mxu0 %v462
      %v689 = vpop.f32.mrb[0].mxu0
      %v690 = vadd.f32 %v242, %v689
      %v691 = vpop.f32.mrb[0].mxu0
      %v692 = vpop.f32.mrb[0].mxu0
      %v693 = vadd.f32 %v242, %v692
      %v694 = vpop.f32.mrb[0].mxu0
      %695 = vmatprep.mubr.bf16.mxu0 0
      %696 = vmatmul.mubr.bf16.gmra.mrb[0].mxu0 %v465
      %v697 = vpop.f32.mrb[0].mxu0
      %v698 = vadd.f32 %v242, %v697
      %v699 = vpop.f32.mrb[0].mxu0
      %v700 = vpop.f32.mrb[0].mxu0
      %v701 = vadd.f32 %v242, %v700
      %v702 = vpop.f32.mrb[0].mxu0
      %703 = vmatprep.mubr.bf16.mxu0 0
      %704 = vmatmul.mubr.bf16.gmra.mrb[0].mxu0 %v468
      %v705 = vpop.f32.mrb[0].mxu0
      %v706 = vadd.f32 %v242, %v705
      %v707 = vpop.f32.mrb[0].mxu0
      %v708 = vpop.f32.mrb[0].mxu0
      %v709 = vadd.f32 %v242, %v708
      %v710 = vpop.f32.mrb[0].mxu0
      %711 = vmatprep.mubr.bf16.mxu0 0
      %712 = vmatmul.mubr.bf16.gmra.mrb[0].mxu0 %v471
      %v713 = vpop.f32.mrb[0].mxu0
      %v714 = vadd.f32 %v242, %v713
      %v715 = vpop.f32.mrb[0].mxu0
      %v716 = vpop.f32.mrb[0].mxu0
      %v717 = vadd.f32 %v242, %v716
      %v718 = vpop.f32.mrb[0].mxu0
      %719 = vmatprep.mubr.bf16.mxu0 0
      %720 = vmatmul.mubr.bf16.gmra.mrb[0].mxu0 %v474
      %v721 = vpop.f32.mrb[0].mxu0
      %v722 = vadd.f32 %v242, %v721
      %v723 = vpop.f32.mrb[0].mxu0
      %v724 = vpop.f32.mrb[0].mxu0
      %v725 = vadd.f32 %v242, %v724
      %v726 = vpop.f32.mrb[0].mxu0
      %727 = vmatprep.mubr.bf16.mxu0 0
      %728 = vmatmul.mubr.bf16.gmra.mrb[0].mxu0 %v477
      %v729 = vpop.f32.mrb[0].mxu0
      %v730 = vadd.f32 %v242, %v729
      %v731 = vpop.f32.mrb[0].mxu0
      %v732 = vpop.f32.mrb[0].mxu0
      %v733 = vadd.f32 %v242, %v732
      %v734 = vpop.f32.mrb[0].mxu0
      %735 = vmatprep.mubr.bf16.mxu0 0
      %736 = vmatmul.mubr.bf16.gmra.mrb[0].mxu0 %v480
      %v737 = vpop.f32.mrb[0].mxu0
      %v738 = vadd.f32 %v242, %v737
      %v739 = vpop.f32.mrb[0].mxu0
      %v740 = vpop.f32.mrb[0].mxu0
      %v741 = vadd.f32 %v242, %v740
      %v742 = vpop.f32.mrb[0].mxu0
      %743 = vmatprep.mubr.bf16.mxu0 0
      %744 = vmatmul.mubr.bf16.gmra.mrb[0].mxu0 %v483
      %v745 = vpop.f32.mrb[0].mxu0
      %v746 = vadd.f32 %v242, %v745
      %v747 = vpop.f32.mrb[0].mxu0
      %v748 = vpop.f32.mrb[0].mxu0
      %v749 = vadd.f32 %v242, %v748
      %v750 = vpop.f32.mrb[0].mxu0
      %751 = vmatprep.mubr.bf16.mxu0 0
      %752 = vmatmul.mubr.bf16.gmra.mrb[0].mxu0 %v486
      %v753 = vpop.f32.mrb[0].mxu0
      %v754 = vadd.f32 %v242, %v753
      %v755 = vpop.f32.mrb[0].mxu0
      %v756 = vpop.f32.mrb[0].mxu0
      %v757 = vadd.f32 %v242, %v756
      %v758 = vpop.f32.mrb[0].mxu0
      %759 = vdwg.mxu0
      %v760 = vmax.f32 %v530, 0.0
      %v761 = vmax.f32 %v533, 0.0
      %v762 = vmax.f32 %v538, 0.0
      %v763 = vmax.f32 %v541, 0.0
      %v764 = vmax.f32 %v546, 0.0
      %v765 = vmax.f32 %v549, 0.0
      %v766 = vmax.f32 %v554, 0.0
      %v767 = vmax.f32 %v557, 0.0
      %v768 = vmax.f32 %v562, 0.0
      %v769 = vmax.f32 %v565, 0.0
      %v770 = vmax.f32 %v570, 0.0
      %v771 = vmax.f32 %v573, 0.0
      %v772 = vmax.f32 %v578, 0.0
      %v773 = vmax.f32 %v581, 0.0
      %v774 = vmax.f32 %v586, 0.0
      %v775 = vmax.f32 %v589, 0.0
      %v776 = vmax.f32 %v594, 0.0
      %v777 = vmax.f32 %v597, 0.0
      %v778 = vmax.f32 %v602, 0.0
      %v779 = vmax.f32 %v605, 0.0
      %v780 = vmax.f32 %v610, 0.0
      %v781 = vmax.f32 %v613, 0.0
      %v782 = vmax.f32 %v618, 0.0
      %v783 = vmax.f32 %v621, 0.0
      %v784 = vmax.f32 %v626, 0.0
      %v785 = vmax.f32 %v629, 0.0
      %v786 = vmax.f32 %v634, 0.0
      %v787 = vmax.f32 %v637, 0.0
      %v788 = vmax.f32 %v642, 0.0
      %v789 = vmax.f32 %v645, 0.0
      %v790 = vmax.f32 %v650, 0.0
      %v791 = vmax.f32 %v653, 0.0
      %v792 = vmax.f32 %v658, 0.0
      %v793 = vmax.f32 %v661, 0.0
      %v794 = vmax.f32 %v666, 0.0
      %v795 = vmax.f32 %v669, 0.0
      %v796 = vmax.f32 %v674, 0.0
      %v797 = vmax.f32 %v677, 0.0
      %v798 = vmax.f32 %v682, 0.0
      %v799 = vmax.f32 %v685, 0.0
      %v800 = vmax.f32 %v690, 0.0
      %v801 = vmax.f32 %v693, 0.0
      %v802 = vmax.f32 %v698, 0.0
      %v803 = vmax.f32 %v701, 0.0
      %v804 = vmax.f32 %v706, 0.0
      %v805 = vmax.f32 %v709, 0.0
      %v806 = vmax.f32 %v714, 0.0
      %v807 = vmax.f32 %v717, 0.0
      %v808 = vmax.f32 %v722, 0.0
      %v809 = vmax.f32 %v725, 0.0
      %v810 = vmax.f32 %v730, 0.0
      %v811 = vmax.f32 %v733, 0.0
      %v812 = vmax.f32 %v738, 0.0
      %v813 = vmax.f32 %v741, 0.0
      %v814 = vmax.f32 %v746, 0.0
      %v815 = vmax.f32 %v749, 0.0
      %v816 = vmax.f32 %v754, 0.0
      %v817 = vmax.f32 %v757, 0.0
      %v818 = vpack.c.bf16 %v761, %v760
      %v819 = vpack.c.bf16 %v763, %v762
      %v820 = vpack.c.bf16 %v765, %v764
      %v821 = vpack.c.bf16 %v767, %v766
      %v822 = vpack.c.bf16 %v769, %v768
      %v823 = vpack.c.bf16 %v771, %v770
      %v824 = vpack.c.bf16 %v773, %v772
      %v825 = vpack.c.bf16 %v775, %v774
      %v826 = vpack.c.bf16 %v777, %v776
      %v827 = vpack.c.bf16 %v779, %v778
      %v828 = vpack.c.bf16 %v781, %v780
      %v829 = vpack.c.bf16 %v783, %v782
      %v830 = vpack.c.bf16 %v785, %v784
      %v831 = vpack.c.bf16 %v787, %v786
      %v832 = vpack.c.bf16 %v789, %v788
      %v833 = vpack.c.bf16 %v791, %v790
      %v834 = vpack.c.bf16 %v793, %v792
      %v835 = vpack.c.bf16 %v795, %v794
      %v836 = vpack.c.bf16 %v797, %v796
      %v837 = vpack.c.bf16 %v799, %v798
      %v838 = vpack.c.bf16 %v801, %v800
      %v839 = vpack.c.bf16 %v803, %v802
      %v840 = vpack.c.bf16 %v805, %v804
      %v841 = vpack.c.bf16 %v807, %v806
      %v842 = vpack.c.bf16 %v809, %v808
      %v843 = vpack.c.bf16 %v811, %v810
      %v844 = vpack.c.bf16 %v813, %v812
      %v845 = vpack.c.bf16 %v815, %v814
      %v846 = vpack.c.bf16 %v817, %v816
      %v876 = vunpack.c.l.b16 %v818
      %v877 = vunpack.c.h.b16 %v818
      %v878 = vunpack.c.l.b16 %v819
      %v879 = vunpack.c.h.b16 %v819
      %v880 = vunpack.c.l.b16 %v820
      %v881 = vunpack.c.h.b16 %v820
      %v882 = vunpack.c.l.b16 %v821
      %v883 = vunpack.c.h.b16 %v821
      %v884 = vunpack.c.l.b16 %v822
      %v885 = vunpack.c.h.b16 %v822
      %v886 = vunpack.c.l.b16 %v823
      %v887 = vunpack.c.h.b16 %v823
      %v888 = vunpack.c.l.b16 %v824
      %v889 = vunpack.c.h.b16 %v824
      %v890 = vunpack.c.l.b16 %v825
      %v891 = vunpack.c.h.b16 %v825
      %v892 = vunpack.c.l.b16 %v826
      %v893 = vunpack.c.h.b16 %v826
      %v894 = vunpack.c.l.b16 %v827
      %v895 = vunpack.c.h.b16 %v827
      %v896 = vunpack.c.l.b16 %v828
      %v897 = vunpack.c.h.b16 %v828
      %v898 = vunpack.c.l.b16 %v829
      %v899 = vunpack.c.h.b16 %v829
      %v900 = vunpack.c.l.b16 %v830
      %v901 = vunpack.c.h.b16 %v830
      %v902 = vunpack.c.l.b16 %v831
      %v903 = vunpack.c.h.b16 %v831
      %v904 = vunpack.c.l.b16 %v832
      %v905 = vunpack.c.h.b16 %v832
      %v906 = vunpack.c.l.b16 %v833
      %v907 = vunpack.c.h.b16 %v833
      %v908 = vunpack.c.l.b16 %v834
      %v909 = vunpack.c.h.b16 %v834
      %v910 = vunpack.c.l.b16 %v835
      %v911 = vunpack.c.h.b16 %v835
      %v912 = vunpack.c.l.b16 %v836
      %v913 = vunpack.c.h.b16 %v836
      %v914 = vunpack.c.l.b16 %v837
      %v915 = vunpack.c.h.b16 %v837
      %v916 = vunpack.c.l.b16 %v838
      %v917 = vunpack.c.h.b16 %v838
      %v918 = vunpack.c.l.b16 %v839
      %v919 = vunpack.c.h.b16 %v839
      %v920 = vunpack.c.l.b16 %v840
      %v921 = vunpack.c.h.b16 %v840
      %v922 = vunpack.c.l.b16 %v841
      %v923 = vunpack.c.h.b16 %v841
      %v924 = vunpack.c.l.b16 %v842
      %v925 = vunpack.c.h.b16 %v842
      %v926 = vunpack.c.l.b16 %v843
      %v927 = vunpack.c.h.b16 %v843
      %v928 = vunpack.c.l.b16 %v844
      %v929 = vunpack.c.h.b16 %v844
      %v930 = vunpack.c.l.b16 %v845
      %v931 = vunpack.c.h.b16 %v845
      %v932 = vunpack.c.l.b16 %v846
      %v933 = vunpack.c.h.b16 %v846
      %v934 = vpack.c.b16 %v876, %v876
      %v935 = vpack.c.b16 %v877, %v877
      %v936 = vpack.c.b16 %v878, %v878
      %v937 = vpack.c.b16 %v879, %v879
      %v938 = vpack.c.b16 %v880, %v880
      %v939 = vpack.c.b16 %v881, %v881
      %v940 = vpack.c.b16 %v882, %v882
      %v941 = vpack.c.b16 %v883, %v883
      %v942 = vpack.c.b16 %v884, %v884
      %v943 = vpack.c.b16 %v885, %v885
      %v944 = vpack.c.b16 %v886, %v886
      %v945 = vpack.c.b16 %v887, %v887
      %v946 = vpack.c.b16 %v888, %v888
      %v947 = vpack.c.b16 %v889, %v889
      %v948 = vpack.c.b16 %v890, %v890
      %v949 = vpack.c.b16 %v891, %v891
      %v950 = vpack.c.b16 %v892, %v892
      %v951 = vpack.c.b16 %v893, %v893
      %v952 = vpack.c.b16 %v894, %v894
      %v953 = vpack.c.b16 %v895, %v895
      %v954 = vpack.c.b16 %v896, %v896
      %v955 = vpack.c.b16 %v897, %v897
      %v956 = vpack.c.b16 %v898, %v898
      %v957 = vpack.c.b16 %v899, %v899
      %v958 = vpack.c.b16 %v900, %v900
      %v959 = vpack.c.b16 %v901, %v901
      %v960 = vpack.c.b16 %v902, %v902
      %v961 = vpack.c.b16 %v903, %v903
      %v962 = vpack.c.b16 %v904, %v904
      %v963 = vpack.c.b16 %v905, %v905
      %v964 = vpack.c.b16 %v906, %v906
      %v965 = vpack.c.b16 %v907, %v907
      %v966 = vpack.c.b16 %v908, %v908
      %v967 = vpack.c.b16 %v909, %v909
      %v968 = vpack.c.b16 %v910, %v910
      %v969 = vpack.c.b16 %v911, %v911
      %v970 = vpack.c.b16 %v912, %v912
      %v971 = vpack.c.b16 %v913, %v913
      %v972 = vpack.c.b16 %v914, %v914
      %v973 = vpack.c.b16 %v915, %v915
      %v974 = vpack.c.b16 %v916, %v916
      %v975 = vpack.c.b16 %v917, %v917
      %v976 = vpack.c.b16 %v918, %v918
      %v977 = vpack.c.b16 %v919, %v919
      %v978 = vpack.c.b16 %v920, %v920
      %v979 = vpack.c.b16 %v921, %v921
      %v980 = vpack.c.b16 %v922, %v922
      %v981 = vpack.c.b16 %v923, %v923
      %v982 = vpack.c.b16 %v924, %v924
      %v983 = vpack.c.b16 %v925, %v925
      %v984 = vpack.c.b16 %v926, %v926
      %v985 = vpack.c.b16 %v927, %v927
      %v986 = vpack.c.b16 %v928, %v928
      %v987 = vpack.c.b16 %v929, %v929
      %v988 = vpack.c.b16 %v930, %v930
      %v989 = vpack.c.b16 %v931, %v931
      %v990 = vpack.c.b16 %v932, %v932
      %v991 = vpack.c.b16 %v933, %v933
      %vm1050 = vcmask 257024
      %1051 = vst.msk [vmem:[%s172] sm:$0xf] %vm1050, %v934
      %1052 = vst.msk [vmem:[%s172 + $0x4] sm:$0xf] %vm1050, %v935
      %1053 = vst.msk [vmem:[%s172 + $0x8] sm:$0xf] %vm1050, %v936
      %1054 = vst.msk [vmem:[%s172 + $0xc] sm:$0xf] %vm1050, %v937
      %1055 = vst.msk [vmem:[%s172 + $0x10] sm:$0xf] %vm1050, %v938
      %1056 = vst.msk [vmem:[%s172 + $0x14] sm:$0xf] %vm1050, %v939
      %1057 = vst.msk [vmem:[%s172 + $0x18] sm:$0xf] %vm1050, %v940
      %1058 = vst.msk [vmem:[%s172 + $0x1c] sm:$0xf] %vm1050, %v941
      %1059 = vst.msk [vmem:[%s172 + $0x20] sm:$0xf] %vm1050, %v942
      %1060 = vst.msk [vmem:[%s172 + $0x24] sm:$0xf] %vm1050, %v943
      %1061 = vst.msk [vmem:[%s172 + $0x28] sm:$0xf] %vm1050, %v944
      %1062 = vst.msk [vmem:[%s172 + $0x2c] sm:$0xf] %vm1050, %v945
      %1063 = vst.msk [vmem:[%s172 + $0x30] sm:$0xf] %vm1050, %v946
      %1064 = vst.msk [vmem:[%s172 + $0x34] sm:$0xf] %vm1050, %v947
      %1065 = vst.msk [vmem:[%s172 + $0x38] sm:$0xf] %vm1050, %v948
      %1066 = vst.msk [vmem:[%s172 + $0x3c] sm:$0xf] %vm1050, %v949
      %1067 = vst.msk [vmem:[%s172 + $0x40] sm:$0xf] %vm1050, %v950
      %1068 = vst.msk [vmem:[%s172 + $0x44] sm:$0xf] %vm1050, %v951
      %1069 = vst.msk [vmem:[%s172 + $0x48] sm:$0xf] %vm1050, %v952
      %1070 = vst.msk [vmem:[%s172 + $0x4c] sm:$0xf] %vm1050, %v953
      %1071 = vst.msk [vmem:[%s172 + $0x50] sm:$0xf] %vm1050, %v954
      %1072 = vst.msk [vmem:[%s172 + $0x54] sm:$0xf] %vm1050, %v955
      %1073 = vst.msk [vmem:[%s172 + $0x58] sm:$0xf] %vm1050, %v956
      %1074 = vst.msk [vmem:[%s172 + $0x5c] sm:$0xf] %vm1050, %v957
      %1075 = vst.msk [vmem:[%s172 + $0x60] sm:$0xf] %vm1050, %v958
      %1076 = vst.msk [vmem:[%s172 + $0x64] sm:$0xf] %vm1050, %v959
      %1077 = vst.msk [vmem:[%s172 + $0x68] sm:$0xf] %vm1050, %v960
      %1078 = vst.msk [vmem:[%s172 + $0x6c] sm:$0xf] %vm1050, %v961
      %1079 = vst.msk [vmem:[%s172 + $0x70] sm:$0xf] %vm1050, %v962
      %1080 = vst.msk [vmem:[%s172 + $0x74] sm:$0xf] %vm1050, %v963
      %1081 = vst.msk [vmem:[%s172 + $0x78] sm:$0xf] %vm1050, %v964
      %1082 = vst.msk [vmem:[%s172 + $0x7c] sm:$0xf] %vm1050, %v965
      %1083 = vst.msk [vmem:[%s172 + $0x80] sm:$0xf] %vm1050, %v966
      %1084 = vst.msk [vmem:[%s172 + $0x84] sm:$0xf] %vm1050, %v967
      %1085 = vst.msk [vmem:[%s172 + $0x88] sm:$0xf] %vm1050, %v968
      %1086 = vst.msk [vmem:[%s172 + $0x8c] sm:$0xf] %vm1050, %v969
      %1087 = vst.msk [vmem:[%s172 + $0x90] sm:$0xf] %vm1050, %v970
      %1088 = vst.msk [vmem:[%s172 + $0x94] sm:$0xf] %vm1050, %v971
      %1089 = vst.msk [vmem:[%s172 + $0x98] sm:$0xf] %vm1050, %v972
      %1090 = vst.msk [vmem:[%s172 + $0x9c] sm:$0xf] %vm1050, %v973
      %1091 = vst.msk [vmem:[%s172 + $0xa0] sm:$0xf] %vm1050, %v974
      %1092 = vst.msk [vmem:[%s172 + $0xa4] sm:$0xf] %vm1050, %v975
      %1093 = vst.msk [vmem:[%s172 + $0xa8] sm:$0xf] %vm1050, %v976
      %1094 = vst.msk [vmem:[%s172 + $0xac] sm:$0xf] %vm1050, %v977
      %1095 = vst.msk [vmem:[%s172 + $0xb0] sm:$0xf] %vm1050, %v978
      %1096 = vst.msk [vmem:[%s172 + $0xb4] sm:$0xf] %vm1050, %v979
      %1097 = vst.msk [vmem:[%s172 + $0xb8] sm:$0xf] %vm1050, %v980
      %1098 = vst.msk [vmem:[%s172 + $0xbc] sm:$0xf] %vm1050, %v981
      %1099 = vst.msk [vmem:[%s172 + $0xc0] sm:$0xf] %vm1050, %v982
      %1100 = vst.msk [vmem:[%s172 + $0xc4] sm:$0xf] %vm1050, %v983
      %1101 = vst.msk [vmem:[%s172 + $0xc8] sm:$0xf] %vm1050, %v984
      %1102 = vst.msk [vmem:[%s172 + $0xcc] sm:$0xf] %vm1050, %v985
      %1103 = vst.msk [vmem:[%s172 + $0xd0] sm:$0xf] %vm1050, %v986
      %1104 = vst.msk [vmem:[%s172 + $0xd4] sm:$0xf] %vm1050, %v987
      %1105 = vst.msk [vmem:[%s172 + $0xd8] sm:$0xf] %vm1050, %v988
      %1106 = vst.msk [vmem:[%s172 + $0xdc] sm:$0xf] %vm1050, %v989
      %1107 = vst.msk [vmem:[%s172 + $0xe0] sm:$0xf] %vm1050, %v990
      %1108 = vst.msk [vmem:[%s172 + $0xe4] sm:$0xf] %vm1050, %v991
      %s1109 = smul.u32 58, %s14
      %p1110 = scmp.lt.s32.totalorder %s1109, 347
      %s1111 = scalar_select %p1110, %s1109, 347
      %s1112 = smul.addr %s1111, 4
      %s1113 = scalar_lea.vmem %s3, %s1112
      // Predicated region
      $region33: #{tpu_custom_call.1} parent=31 // pred_check
        %p1114 = pneg %p100
      $region34: #{tpu_custom_call.1} parent=31 // pred_check_branch
        %1116 = sbr.rel (%p1114) target = $region36
      $region35: #{tpu_custom_call.1} parent=31 // pred_region
        %s1117 = smul.u32 58, %s14
      $region36: #{tpu_custom_call.1} parent=31 // pred_fallthru
        _
    $region32: #{tpu_custom_call.1} parent=5 // pred_fallthru
      _
    %p1118 = scmp.le.s32.totalorder 2, %s9
    // Predicated region
    $region37: #{tpu_custom_call.1} parent=5 // pred_check
      %p1119 = pneg %p1118
    $region38: #{tpu_custom_call.1} parent=5 // pred_check_branch
      %1121 = sbr.rel (%p1119) target = $region40
    $region39: #{tpu_custom_call.1} parent=5 // pred_region
      %s1122 = ssub.s32 %s9, 2
      // Predicated region
      $region41: #{tpu_custom_call.1} parent=39 // pred_check
        %p1123 = pneg %p106
      $region42: #{tpu_custom_call.1} parent=39 // pred_check_branch
        %1125 = sbr.rel (%p1123) target = $region44
      $region43: #{tpu_custom_call.1} parent=39 // pred_region
        %s1126 = smul.u32 58, %s15
        %p1127 = scmp.lt.s32.totalorder %s1126, 347
        %s1128 = scalar_select %p1127, %s1126, 347
        %s1129 = smul.addr %s1128, 4
        %s1130 = scalar_lea.vmem %s3, %s1129
      $region44: #{tpu_custom_call.1} parent=39 // pred_fallthru
        _
    $region40: #{tpu_custom_call.1} parent=5 // pred_fallthru
      _
  $region6: #{tpu_custom_call.1} parent=0 // loop_footer
    %s13 = sadd.s32 1, %s9
  $region7: #{tpu_custom_call.1} parent=0 // loop_footer_branch
    %8 = sbr.rel target = $region3
  $region8: #{tpu_custom_call.1} parent=0 // loop_exit
    _

</llo_original>
